<compile_context>
chip_gen: v7x
topology: tpu7x:2x2x1
jax: 0.10.0
libtpu: 0.0.40
codegen_flags: <defaults>
</compile_context>

<pallas_src>
import jax
import jax.numpy as jnp
from jax import lax
from jax.experimental import pallas as pl
from jax.experimental.pallas import tpu as pltpu

LN_EPS = 1e-5       # torch.nn.LayerNorm default eps
NORM_EPS = 1e-12    # torch.nn.functional.normalize default eps


def _layernorm_cols(h, gamma, beta):
    """LayerNorm over the feature axis (axis 0) of a (features, rows) tile."""
    mu = jnp.mean(h, axis=0, keepdims=True)
    var = jnp.mean((h - mu) * (h - mu), axis=0, keepdims=True)
    return (h - mu) * lax.rsqrt(var + LN_EPS) * gamma + beta


def suction_sampler_kernel(x_ref, w1_ref, g1_ref, b1_ref,
                           w2_ref, g2_ref, b2_ref,
                           w3_ref, b3_ref, o_ref):
    x = x_ref[...].astype(jnp.float32)                              # (tile_m, 64)

    # Linear(64->32, no bias), feature-major: h1^T = W1 @ x^T.
    # Contract the 64-axis of both operands (A @ B^T), so the big x tile is
    # never explicitly transposed.
    h = lax.dot_general(w1_ref[...], x, (((1,), (1,)), ((), ())),
                        preferred_element_type=jnp.float32)          # (32, tile_m)
    h = _layernorm_cols(h, g1_ref[...], b1_ref[...])
    h = jnp.maximum(h, 0.0)

    # Linear(32->16, no bias) + LayerNorm(16) + ReLU, still feature-major.
    h = jnp.dot(w2_ref[...], h, preferred_element_type=jnp.float32)  # (16, tile_m)
    h = _layernorm_cols(h, g2_ref[...], b2_ref[...])
    h = jnp.maximum(h, 0.0)

    # Linear(16->3, bias).  W3/b3 arrive zero-padded to 8 rows; rows 3..7 of
    # `out` are exactly zero, so they do not perturb the column norms below.
    out = jnp.dot(w3_ref[...], h, preferred_element_type=jnp.float32)  # (8, tile_m)
    out = out + b3_ref[...]

    # F.normalize(., dim=1): v / max(||v||, eps) == v * rsqrt(max(sum v^2, eps^2))
    sumsq = jnp.sum(out * out, axis=0, keepdims=True)                 # (1, tile_m)
    out = out * lax.rsqrt(jnp.maximum(sumsq, NORM_EPS * NORM_EPS))

    # Lane-dense store: (3, tile_m), lanes = tile_m (multiple of 128 when tiled).
    o_ref[...] = out[:3, :].astype(o_ref.dtype)


def suction_part_sampler(x, params, *, tile_m=8192):
    """x: (N, 64) float32 or bfloat16.  Returns (N, 3) float32 unit vectors."""
    n, d_in = x.shape
    assert d_in == 64
    w1, g1, b1, w2, g2, b2, w3, b3 = params   # native PyTorch (out, in) layouts

    # Pad W3 (3,16) / b3 (3,1) to 8 output rows with zeros (sublane alignment).
    w3p = jnp.pad(w3, ((0, 8 - w3.shape[0]), (0, 0)))
    b3p = jnp.pad(b3, ((0, 8 - b3.shape[0]), (0, 0)))

    # ---- row-tile selection -------------------------------------------------
    # Small inputs: a single grid step over the whole array (skip pipeline
    # overhead).  Large inputs: big lane-dense tiles, and best effort an even
    # number of "parallel" steps so both v7x TensorCores get work (v5e/v6e have
    # a single TensorCore, so this is a no-op there).
    if n <= tile_m:
        tm = n
    else:
        assert tile_m % 128 == 0, "tile_m must be a multiple of 128"
        tm = tile_m
        if (pl.cdiv(n, tm) % 2 == 1 and tm % 256 == 0
                and pl.cdiv(n, tm // 2) % 2 == 0):
            tm //= 2
    n_pad = pl.cdiv(n, tm) * tm
    if n_pad != n:
        x = jnp.pad(x, ((0, n_pad - n), (0, 0)))   # zero rows are harmless
    grid = (n_pad // tm,)

    full = lambda a: pl.BlockSpec(a.shape, lambda i: (0, 0))

    out_t = pl.pallas_call(
        suction_sampler_kernel,
        out_shape=jax.ShapeDtypeStruct((3, n_pad), jnp.float32),
        grid=grid,
        in_specs=[
            pl.BlockSpec((tm, 64), lambda i: (i, 0)),   # x tile: rows i*tm..
            full(w1),                                    # (32, 64)
            full(g1), full(b1),                          # (32, 1) LN1 gamma/beta
            full(w2),                                    # (16, 32)
            full(g2), full(b2),                          # (16, 1) LN2 gamma/beta
            full(w3p),                                   # (8, 16)  zero-padded
            full(b3p),                                   # (8, 1)   zero-padded
        ],
        out_specs=pl.BlockSpec((3, tm), lambda i: (0, i)),
        compiler_params=pltpu.CompilerParams(
            dimension_semantics=("parallel",),
            vmem_limit_bytes=32 * 1024 * 1024,
        ),
    )(x, w1, g1, b1, w2, g2, b2, w3p, b3p)

    # (3, N) -> (N, 3): a 12*N-byte transpose done once by XLA, negligible next
    # to the 256*N-byte input read; keeps every in-kernel store lane-dense.
    return out_t[:, :n].T


def make_params(key):
    """Deterministic synthetic parameters in native PyTorch layouts."""
    k1, k2, k3, k4 = jax.random.split(key, 4)
    w1 = jax.random.normal(k1, (32, 64), jnp.float32) * (1.0 / jnp.sqrt(64.0))
    w2 = jax.random.normal(k2, (16, 32), jnp.float32) * (1.0 / jnp.sqrt(32.0))
    w3 = jax.random.normal(k3, (3, 16), jnp.float32) * (1.0 / jnp.sqrt(16.0))
    b3 = jax.random.normal(k4, (3, 1), jnp.float32) * 0.1
    g1 = jnp.ones((32, 1), jnp.float32); b1 = jnp.zeros((32, 1), jnp.float32)
    g2 = jnp.ones((16, 1), jnp.float32); b2 = jnp.zeros((16, 1), jnp.float32)
    return (w1, g1, b1, w2, g2, b2, w3, b3)


def reference(x, params):
    """Pure-JAX row-major reference mirroring the PyTorch module exactly."""
    w1, g1, b1, w2, g2, b2, w3, b3 = params
    hp = lax.Precision.HIGHEST
    h = jnp.dot(x, w1.T, precision=hp)
    mu = jnp.mean(h, axis=-1, keepdims=True)
    var = jnp.mean((h - mu) ** 2, axis=-1, keepdims=True)
    h = jnp.maximum((h - mu) * lax.rsqrt(var + LN_EPS) * g1.T + b1.T, 0.0)
    h = jnp.dot(h, w2.T, precision=hp)
    mu = jnp.mean(h, axis=-1, keepdims=True)
    var = jnp.mean((h - mu) ** 2, axis=-1, keepdims=True)
    h = jnp.maximum((h - mu) * lax.rsqrt(var + LN_EPS) * g2.T + b2.T, 0.0)
    out = jnp.dot(h, w3.T, precision=hp) + b3.T
    nrm = jnp.sqrt(jnp.sum(out * out, axis=-1, keepdims=True))
    return out / jnp.maximum(nrm, NORM_EPS)


if __name__ == "__main__":
    key = jax.random.PRNGKey(0)
    kx, kp = jax.random.split(key)

    N = 256  # small demo batch of 64-dim point features
    x = jax.random.normal(kx, (N, 64), jnp.float32)
    params = make_params(kp)
    ref = reference(x, params)

    # 1) Default path: single grid step for small inputs.
    out = jax.block_until_ready(suction_part_sampler(x, params))
    assert out.shape == (N, 3)
    assert jnp.allclose(out, ref, atol=2e-5, rtol=2e-5)
    assert jnp.allclose(jnp.linalg.norm(out, axis=1), 1.0, atol=1e-5)

    # 2) Multi-tile path: exercises the pipelined "parallel" grid (2 steps).
    out_tiled = jax.block_until_ready(suction_part_sampler(x, params, tile_m=128))
    assert jnp.allclose(out_tiled, ref, atol=2e-5, rtol=2e-5)

    # 3) bfloat16 inputs accepted (halves HBM read traffic; math stays f32).
    out_bf16 = jax.block_until_ready(
        suction_part_sampler(x.astype(jnp.bfloat16), params))
    assert jnp.allclose(out_bf16, ref, atol=5e-2, rtol=5e-2)
    assert jnp.allclose(jnp.linalg.norm(out_bf16, axis=1), 1.0, atol=1e-5)

    print("KERNEL_OK")
</pallas_src>

<mosaic_0001>
module attributes {stable_mosaic.version = 11 : i64} {
  func.func @suction_sampler_kernel(%arg0: i32, %arg1: memref<256x64xf32, #tpu.memory_space<vmem>>, %arg2: memref<32x64xf32, #tpu.memory_space<vmem>>, %arg3: memref<32x1xf32, #tpu.memory_space<vmem>>, %arg4: memref<32x1xf32, #tpu.memory_space<vmem>>, %arg5: memref<16x32xf32, #tpu.memory_space<vmem>>, %arg6: memref<16x1xf32, #tpu.memory_space<vmem>>, %arg7: memref<16x1xf32, #tpu.memory_space<vmem>>, %arg8: memref<8x16xf32, #tpu.memory_space<vmem>>, %arg9: memref<8x1xf32, #tpu.memory_space<vmem>>, %arg10: memref<3x256xf32, #tpu.memory_space<vmem>>) attributes {dimension_semantics = [#tpu.dimension_semantics<parallel>], iteration_bounds = array<i64: 1>, scalar_prefetch = 0 : i64, scratch_operands = 0 : i64, tpu.core_type = #tpu.core_type<tc>, window_params = [{transform_indices = @transform_0, window_bounds = array<i64: 256, 64>}, {pipeline_mode = #tpu.pipeline_mode<synchronous>, transform_indices = @transform_1, window_bounds = array<i64: 32, 64>}, {pipeline_mode = #tpu.pipeline_mode<synchronous>, transform_indices = @transform_2, window_bounds = array<i64: 32, 1>}, {pipeline_mode = #tpu.pipeline_mode<synchronous>, transform_indices = @transform_3, window_bounds = array<i64: 32, 1>}, {pipeline_mode = #tpu.pipeline_mode<synchronous>, transform_indices = @transform_4, window_bounds = array<i64: 16, 32>}, {pipeline_mode = #tpu.pipeline_mode<synchronous>, transform_indices = @transform_5, window_bounds = array<i64: 16, 1>}, {pipeline_mode = #tpu.pipeline_mode<synchronous>, transform_indices = @transform_6, window_bounds = array<i64: 16, 1>}, {pipeline_mode = #tpu.pipeline_mode<synchronous>, transform_indices = @transform_7, window_bounds = array<i64: 8, 16>}, {pipeline_mode = #tpu.pipeline_mode<synchronous>, transform_indices = @transform_8, window_bounds = array<i64: 8, 1>}, {transform_indices = @transform_9, window_bounds = array<i64: 3, 256>}]} {
    %c0 = arith.constant 0 : index
    %c0_0 = arith.constant 0 : index
    %0 = vector.load %arg1[%c0, %c0_0] : memref<256x64xf32, #tpu.memory_space<vmem>>, vector<256x64xf32>
    %c0_1 = arith.constant 0 : index
    %c0_2 = arith.constant 0 : index
    %1 = vector.load %arg2[%c0_1, %c0_2] : memref<32x64xf32, #tpu.memory_space<vmem>>, vector<32x64xf32>
    %cst = arith.constant dense<0.000000e+00> : vector<32x256xf32>
    %2 = tpu.matmul %1, %0, %cst {dimension_numbers = #tpu.dot_dimension_numbers<[1], [1], [0], [0], [0, 0, 1, 0], [], []>} : vector<32x64xf32>, vector<256x64xf32>, vector<32x256xf32> -> vector<32x256xf32>
    %c0_3 = arith.constant 0 : index
    %c0_4 = arith.constant 0 : index
    %3 = vector.load %arg3[%c0_3, %c0_4] : memref<32x1xf32, #tpu.memory_space<vmem>>, vector<32x1xf32>
    %c0_5 = arith.constant 0 : index
    %c0_6 = arith.constant 0 : index
    %4 = vector.load %arg4[%c0_5, %c0_6] : memref<32x1xf32, #tpu.memory_space<vmem>>, vector<32x1xf32>
    %cst_7 = arith.constant dense<0.000000e+00> : vector<256xf32>
    %5 = vector.multi_reduction <add>, %2, %cst_7 [0] : vector<32x256xf32> to vector<256xf32>
    %6 = vector.shape_cast %5 : vector<256xf32> to vector<1x256xf32>
    %cst_8 = arith.constant 3.200000e+01 : f32
    %7 = vector.broadcast %cst_8 : f32 to vector<1x256xf32>
    %8 = arith.divf %6, %7 : vector<1x256xf32>
    %9 = vector.broadcast %8 : vector<1x256xf32> to vector<32x256xf32>
    %10 = arith.subf %2, %9 : vector<32x256xf32>
    %11 = vector.broadcast %8 : vector<1x256xf32> to vector<32x256xf32>
    %12 = arith.subf %2, %11 : vector<32x256xf32>
    %13 = arith.mulf %10, %12 : vector<32x256xf32>
    %cst_9 = arith.constant dense<0.000000e+00> : vector<256xf32>
    %14 = vector.multi_reduction <add>, %13, %cst_9 [0] : vector<32x256xf32> to vector<256xf32>
    %15 = vector.shape_cast %14 : vector<256xf32> to vector<1x256xf32>
    %cst_10 = arith.constant 3.200000e+01 : f32
    %16 = vector.broadcast %cst_10 : f32 to vector<1x256xf32>
    %17 = arith.divf %15, %16 : vector<1x256xf32>
    %18 = vector.broadcast %8 : vector<1x256xf32> to vector<32x256xf32>
    %19 = arith.subf %2, %18 : vector<32x256xf32>
    %cst_11 = arith.constant 9.99999974E-6 : f32
    %20 = vector.broadcast %cst_11 : f32 to vector<1x256xf32>
    %21 = arith.addf %17, %20 : vector<1x256xf32>
    %22 = math.rsqrt %21 : vector<1x256xf32>
    %23 = vector.broadcast %22 : vector<1x256xf32> to vector<32x256xf32>
    %24 = arith.mulf %19, %23 : vector<32x256xf32>
    %25 = vector.broadcast %3 : vector<32x1xf32> to vector<32x256xf32>
    %26 = arith.mulf %24, %25 : vector<32x256xf32>
    %27 = vector.broadcast %4 : vector<32x1xf32> to vector<32x256xf32>
    %28 = arith.addf %26, %27 : vector<32x256xf32>
    %cst_12 = arith.constant 0.000000e+00 : f32
    %29 = vector.broadcast %cst_12 : f32 to vector<32x256xf32>
    %30 = arith.maximumf %28, %29 : vector<32x256xf32>
    %c0_13 = arith.constant 0 : index
    %c0_14 = arith.constant 0 : index
    %31 = vector.load %arg5[%c0_13, %c0_14] : memref<16x32xf32, #tpu.memory_space<vmem>>, vector<16x32xf32>
    %cst_15 = arith.constant dense<0.000000e+00> : vector<16x256xf32>
    %32 = tpu.matmul %31, %30, %cst_15 {dimension_numbers = #tpu.dot_dimension_numbers<[1], [0], [0], [1], [0, 0, 1, 1], [], []>} : vector<16x32xf32>, vector<32x256xf32>, vector<16x256xf32> -> vector<16x256xf32>
    %c0_16 = arith.constant 0 : index
    %c0_17 = arith.constant 0 : index
    %33 = vector.load %arg6[%c0_16, %c0_17] : memref<16x1xf32, #tpu.memory_space<vmem>>, vector<16x1xf32>
    %c0_18 = arith.constant 0 : index
    %c0_19 = arith.constant 0 : index
    %34 = vector.load %arg7[%c0_18, %c0_19] : memref<16x1xf32, #tpu.memory_space<vmem>>, vector<16x1xf32>
    %cst_20 = arith.constant dense<0.000000e+00> : vector<256xf32>
    %35 = vector.multi_reduction <add>, %32, %cst_20 [0] : vector<16x256xf32> to vector<256xf32>
    %36 = vector.shape_cast %35 : vector<256xf32> to vector<1x256xf32>
    %cst_21 = arith.constant 1.600000e+01 : f32
    %37 = vector.broadcast %cst_21 : f32 to vector<1x256xf32>
    %38 = arith.divf %36, %37 : vector<1x256xf32>
    %39 = vector.broadcast %38 : vector<1x256xf32> to vector<16x256xf32>
    %40 = arith.subf %32, %39 : vector<16x256xf32>
    %41 = vector.broadcast %38 : vector<1x256xf32> to vector<16x256xf32>
    %42 = arith.subf %32, %41 : vector<16x256xf32>
    %43 = arith.mulf %40, %42 : vector<16x256xf32>
    %cst_22 = arith.constant dense<0.000000e+00> : vector<256xf32>
    %44 = vector.multi_reduction <add>, %43, %cst_22 [0] : vector<16x256xf32> to vector<256xf32>
    %45 = vector.shape_cast %44 : vector<256xf32> to vector<1x256xf32>
    %cst_23 = arith.constant 1.600000e+01 : f32
    %46 = vector.broadcast %cst_23 : f32 to vector<1x256xf32>
    %47 = arith.divf %45, %46 : vector<1x256xf32>
    %48 = vector.broadcast %38 : vector<1x256xf32> to vector<16x256xf32>
    %49 = arith.subf %32, %48 : vector<16x256xf32>
    %cst_24 = arith.constant 9.99999974E-6 : f32
    %50 = vector.broadcast %cst_24 : f32 to vector<1x256xf32>
    %51 = arith.addf %47, %50 : vector<1x256xf32>
    %52 = math.rsqrt %51 : vector<1x256xf32>
    %53 = vector.broadcast %52 : vector<1x256xf32> to vector<16x256xf32>
    %54 = arith.mulf %49, %53 : vector<16x256xf32>
    %55 = vector.broadcast %33 : vector<16x1xf32> to vector<16x256xf32>
    %56 = arith.mulf %54, %55 : vector<16x256xf32>
    %57 = vector.broadcast %34 : vector<16x1xf32> to vector<16x256xf32>
    %58 = arith.addf %56, %57 : vector<16x256xf32>
    %cst_25 = arith.constant 0.000000e+00 : f32
    %59 = vector.broadcast %cst_25 : f32 to vector<16x256xf32>
    %60 = arith.maximumf %58, %59 : vector<16x256xf32>
    %c0_26 = arith.constant 0 : index
    %c0_27 = arith.constant 0 : index
    %61 = vector.load %arg8[%c0_26, %c0_27] : memref<8x16xf32, #tpu.memory_space<vmem>>, vector<8x16xf32>
    %cst_28 = arith.constant dense<0.000000e+00> : vector<8x256xf32>
    %62 = tpu.matmul %61, %60, %cst_28 {dimension_numbers = #tpu.dot_dimension_numbers<[1], [0], [0], [1], [0, 0, 1, 1], [], []>} : vector<8x16xf32>, vector<16x256xf32>, vector<8x256xf32> -> vector<8x256xf32>
    %c0_29 = arith.constant 0 : index
    %c0_30 = arith.constant 0 : index
    %63 = vector.load %arg9[%c0_29, %c0_30] : memref<8x1xf32, #tpu.memory_space<vmem>>, vector<8x1xf32>
    %64 = vector.broadcast %63 : vector<8x1xf32> to vector<8x256xf32>
    %65 = arith.addf %62, %64 : vector<8x256xf32>
    %66 = arith.mulf %65, %65 : vector<8x256xf32>
    %cst_31 = arith.constant dense<0.000000e+00> : vector<256xf32>
    %67 = vector.multi_reduction <add>, %66, %cst_31 [0] : vector<8x256xf32> to vector<256xf32>
    %68 = vector.shape_cast %67 : vector<256xf32> to vector<1x256xf32>
    %cst_32 = arith.constant 1.000000e-24 : f32
    %69 = vector.broadcast %cst_32 : f32 to vector<1x256xf32>
    %70 = arith.maximumf %68, %69 : vector<1x256xf32>
    %71 = math.rsqrt %70 : vector<1x256xf32>
    %72 = vector.broadcast %71 : vector<1x256xf32> to vector<8x256xf32>
    %73 = arith.mulf %65, %72 : vector<8x256xf32>
    %74 = vector.extract_strided_slice %73 {offsets = [0, 0], sizes = [3, 256], strides = [1, 1]} : vector<8x256xf32> to vector<3x256xf32>
    %c0_33 = arith.constant 0 : index
    %c0_34 = arith.constant 0 : index
    %75 = vector.load %arg10[%c0_33, %c0_34] : memref<3x256xf32, #tpu.memory_space<vmem>>, vector<3x256xf32>
    tpu.vector_store %arg10[%c0_33, %c0_34], %74 {strides = array<i32>} : memref<3x256xf32, #tpu.memory_space<vmem>>, vector<3x256xf32>,
    return
  }
  func.func @transform_0(%arg0: i32) -> (i32, i32) {
    %c0_i32 = arith.constant 0 : i32
    %c0_i32_0 = arith.constant 0 : i32
    return %arg0, %c0_i32 : i32, i32
  }
  func.func @transform_1(%arg0: i32) -> (i32, i32) {
    %c0_i32 = arith.constant 0 : i32
    %c0_i32_0 = arith.constant 0 : i32
    %c0_i32_1 = arith.constant 0 : i32
    return %c0_i32, %c0_i32_0 : i32, i32
  }
  func.func @transform_2(%arg0: i32) -> (i32, i32) {
    %c0_i32 = arith.constant 0 : i32
    %c0_i32_0 = arith.constant 0 : i32
    %c0_i32_1 = arith.constant 0 : i32
    return %c0_i32, %c0_i32_0 : i32, i32
  }
  func.func @transform_3(%arg0: i32) -> (i32, i32) {
    %c0_i32 = arith.constant 0 : i32
    %c0_i32_0 = arith.constant 0 : i32
    %c0_i32_1 = arith.constant 0 : i32
    return %c0_i32, %c0_i32_0 : i32, i32
  }
  func.func @transform_4(%arg0: i32) -> (i32, i32) {
    %c0_i32 = arith.constant 0 : i32
    %c0_i32_0 = arith.constant 0 : i32
    %c0_i32_1 = arith.constant 0 : i32
    return %c0_i32, %c0_i32_0 : i32, i32
  }
  func.func @transform_5(%arg0: i32) -> (i32, i32) {
    %c0_i32 = arith.constant 0 : i32
    %c0_i32_0 = arith.constant 0 : i32
    %c0_i32_1 = arith.constant 0 : i32
    return %c0_i32, %c0_i32_0 : i32, i32
  }
  func.func @transform_6(%arg0: i32) -> (i32, i32) {
    %c0_i32 = arith.constant 0 : i32
    %c0_i32_0 = arith.constant 0 : i32
    %c0_i32_1 = arith.constant 0 : i32
    return %c0_i32, %c0_i32_0 : i32, i32
  }
  func.func @transform_7(%arg0: i32) -> (i32, i32) {
    %c0_i32 = arith.constant 0 : i32
    %c0_i32_0 = arith.constant 0 : i32
    %c0_i32_1 = arith.constant 0 : i32
    return %c0_i32, %c0_i32_0 : i32, i32
  }
  func.func @transform_8(%arg0: i32) -> (i32, i32) {
    %c0_i32 = arith.constant 0 : i32
    %c0_i32_0 = arith.constant 0 : i32
    %c0_i32_1 = arith.constant 0 : i32
    return %c0_i32, %c0_i32_0 : i32, i32
  }
  func.func @transform_9(%arg0: i32) -> (i32, i32) {
    %c0_i32 = arith.constant 0 : i32
    %c0_i32_0 = arith.constant 0 : i32
    return %c0_i32, %arg0 : i32, i32
  }
}

</mosaic_0001>

<llo_original>
// kernel: tpu_custom_call.1
$region0: #{tpu_custom_call.1}
  #allocation0 [shape = 'u32[]', space=smem, size = 0x4, offset = 0x4, fixed_abs, tag = 'smem constant byte address 0x4 - core index']
  #allocation1 [shape = 'u32[144,128]{1,0:T(1,128)}', space=vmem, size = 0x12000, scoped, tag = 'internal scratch']
  %s0 = inlined_call_operand.vmem [shape: f32[256,64], index: 0, kind: input, shape index: {}]
  %s1 = inlined_call_operand.vmem [shape: f32[32,64], index: 1, kind: input, shape index: {}]
  %s2 = inlined_call_operand.vmem [shape: f32[32,1], index: 2, kind: input, shape index: {}]
  %s3 = inlined_call_operand.vmem [shape: f32[32,1], index: 3, kind: input, shape index: {}]
  %s4 = inlined_call_operand.vmem [shape: f32[16,32], index: 4, kind: input, shape index: {}]
  %s5 = inlined_call_operand.vmem [shape: f32[16,1], index: 5, kind: input, shape index: {}]
  %s6 = inlined_call_operand.vmem [shape: f32[16,1], index: 6, kind: input, shape index: {}]
  %s7 = inlined_call_operand.vmem [shape: f32[8,16], index: 7, kind: input, shape index: {}]
  %s8 = inlined_call_operand.vmem [shape: f32[8,1], index: 8, kind: input, shape index: {}]
  %s9 = inlined_call_operand.hbm [shape: f32[3,256], index: 9, kind: output, shape index: {}]
  %s10 = sld [smem:[#allocation0]]
  $region46: #{tpu_custom_call.1} parent=0
    _
  %s12 = ssub.s32 1, %s10
  %s13 = scalar_select 0, %s12, %s10
  $region1: #{tpu_custom_call.1} parent=0
    #allocation2 [shape = 'u8[4096]{0}', space=vmem, size = 0x1000, scoped, tag = 'output window, operand 0, single buffered']
    #allocation3 [shape = 's32[1]{0}', space=sflag, size = 0x4, scoped, tag = 'scoped memory for tpu_custom_call.1']
    %14 = vsyncpa [#allocation3], 0
    // Predicated region
    $region2: #{tpu_custom_call.1} parent=1 // pred_check
      _
    $region3: #{tpu_custom_call.1} parent=1 // pred_check_branch
      %16 = sbr.rel (0) target = $region5
    $region4: #{tpu_custom_call.1} parent=1 // pred_region
      _
    $region5: #{tpu_custom_call.1} parent=1 // pred_fallthru
      _
    // Predicated region
    $region6: #{tpu_custom_call.1} parent=1 // pred_check
      _
    $region7: #{tpu_custom_call.1} parent=1 // pred_check_branch
      %18 = sbr.rel (0) target = $region9
    $region8: #{tpu_custom_call.1} parent=1 // pred_region
      _
    $region9: #{tpu_custom_call.1} parent=1 // pred_fallthru
      _
    // Predicated region
    $region10: #{tpu_custom_call.1} parent=1 // pred_check
      _
    $region11: #{tpu_custom_call.1} parent=1 // pred_check_branch
      %20 = sbr.rel (0) target = $region13
    $region12: #{tpu_custom_call.1} parent=1 // pred_region
      _
    $region13: #{tpu_custom_call.1} parent=1 // pred_fallthru
      _
    // Predicated region
    $region14: #{tpu_custom_call.1} parent=1 // pred_check
      _
    $region15: #{tpu_custom_call.1} parent=1 // pred_check_branch
      %22 = sbr.rel (0) target = $region17
    $region16: #{tpu_custom_call.1} parent=1 // pred_region
      _
    $region17: #{tpu_custom_call.1} parent=1 // pred_fallthru
      _
    // Predicated region
    $region18: #{tpu_custom_call.1} parent=1 // pred_check
      _
    $region19: #{tpu_custom_call.1} parent=1 // pred_check_branch
      %24 = sbr.rel (0) target = $region21
    $region20: #{tpu_custom_call.1} parent=1 // pred_region
      _
    $region21: #{tpu_custom_call.1} parent=1 // pred_fallthru
      _
    // Predicated region
    $region22: #{tpu_custom_call.1} parent=1 // pred_check
      _
    $region23: #{tpu_custom_call.1} parent=1 // pred_check_branch
      %26 = sbr.rel (0) target = $region25
    $region24: #{tpu_custom_call.1} parent=1 // pred_region
      _
    $region25: #{tpu_custom_call.1} parent=1 // pred_fallthru
      _
    // Predicated region
    $region26: #{tpu_custom_call.1} parent=1 // pred_check
      _
    $region27: #{tpu_custom_call.1} parent=1 // pred_check_branch
      %28 = sbr.rel (0) target = $region29
    $region28: #{tpu_custom_call.1} parent=1 // pred_region
      _
    $region29: #{tpu_custom_call.1} parent=1 // pred_fallthru
      _
    // Predicated region
    $region30: #{tpu_custom_call.1} parent=1 // pred_check
      _
    $region31: #{tpu_custom_call.1} parent=1 // pred_check_branch
      %30 = sbr.rel (0) target = $region33
    $region32: #{tpu_custom_call.1} parent=1 // pred_region
      _
    $region33: #{tpu_custom_call.1} parent=1 // pred_fallthru
      _
    // Predicated region
    $region34: #{tpu_custom_call.1} parent=1 // pred_check
      _
    $region35: #{tpu_custom_call.1} parent=1 // pred_check_branch
      %32 = sbr.rel (0) target = $region37
    $region36: #{tpu_custom_call.1} parent=1 // pred_region
      _
    $region37: #{tpu_custom_call.1} parent=1 // pred_fallthru
      _
    %v33 = vld [vmem:[%s0] sm:$0xff]
    %v34 = vld [vmem:[%s0 + $0x8] sm:$0xff]
    %v35 = vld [vmem:[%s0 + $0x10] sm:$0xff]
    %v36 = vld [vmem:[%s0 + $0x18] sm:$0xff]
    %v37 = vld [vmem:[%s0 + $0x20] sm:$0xff]
    %v38 = vld [vmem:[%s0 + $0x28] sm:$0xff]
    %v39 = vld [vmem:[%s0 + $0x30] sm:$0xff]
    %v40 = vld [vmem:[%s0 + $0x38] sm:$0xff]
    %v41 = vld [vmem:[%s0 + $0x40] sm:$0xff]
    %v42 = vld [vmem:[%s0 + $0x48] sm:$0xff]
    %v43 = vld [vmem:[%s0 + $0x50] sm:$0xff]
    %v44 = vld [vmem:[%s0 + $0x58] sm:$0xff]
    %v45 = vld [vmem:[%s0 + $0x60] sm:$0xff]
    %v46 = vld [vmem:[%s0 + $0x68] sm:$0xff]
    %v47 = vld [vmem:[%s0 + $0x70] sm:$0xff]
    %v48 = vld [vmem:[%s0 + $0x78] sm:$0xff]
    %v49 = vld [vmem:[%s0 + $0x80] sm:$0xff]
    %v50 = vld [vmem:[%s0 + $0x88] sm:$0xff]
    %v51 = vld [vmem:[%s0 + $0x90] sm:$0xff]
    %v52 = vld [vmem:[%s0 + $0x98] sm:$0xff]
    %v53 = vld [vmem:[%s0 + $0xa0] sm:$0xff]
    %v54 = vld [vmem:[%s0 + $0xa8] sm:$0xff]
    %v55 = vld [vmem:[%s0 + $0xb0] sm:$0xff]
    %v56 = vld [vmem:[%s0 + $0xb8] sm:$0xff]
    %v57 = vld [vmem:[%s0 + $0xc0] sm:$0xff]
    %v58 = vld [vmem:[%s0 + $0xc8] sm:$0xff]
    %v59 = vld [vmem:[%s0 + $0xd0] sm:$0xff]
    %v60 = vld [vmem:[%s0 + $0xd8] sm:$0xff]
    %v61 = vld [vmem:[%s0 + $0xe0] sm:$0xff]
    %v62 = vld [vmem:[%s0 + $0xe8] sm:$0xff]
    %v63 = vld [vmem:[%s0 + $0xf0] sm:$0xff]
    %v64 = vld [vmem:[%s0 + $0xf8] sm:$0xff]
    %v65 = vld [vmem:[%s1] sm:$0xff]
    %v66 = vld [vmem:[%s1 + $0x8] sm:$0xff]
    %v67 = vld [vmem:[%s1 + $0x10] sm:$0xff]
    %v68 = vld [vmem:[%s1 + $0x18] sm:$0xff]
    %vm69 = vcmask 523264
    %v71 = vsel %vm69, %v65, 0
    %v74 = vsel %vm69, %v66, 0
    %v77 = vsel %vm69, %v67, 0
    %v80 = vsel %vm69, %v68, 0
    %v83 = vsel %vm69, %v33, 0
    %v86 = vsel %vm69, %v34, 0
    %v89 = vsel %vm69, %v35, 0
    %v92 = vsel %vm69, %v36, 0
    %v95 = vsel %vm69, %v37, 0
    %v98 = vsel %vm69, %v38, 0
    %v101 = vsel %vm69, %v39, 0
    %v104 = vsel %vm69, %v40, 0
    %v107 = vsel %vm69, %v41, 0
    %v110 = vsel %vm69, %v42, 0
    %v113 = vsel %vm69, %v43, 0
    %v116 = vsel %vm69, %v44, 0
    %v119 = vsel %vm69, %v45, 0
    %v122 = vsel %vm69, %v46, 0
    %v125 = vsel %vm69, %v47, 0
    %v128 = vsel %vm69, %v48, 0
    %v131 = vsel %vm69, %v49, 0
    %v134 = vsel %vm69, %v50, 0
    %v137 = vsel %vm69, %v51, 0
    %v140 = vsel %vm69, %v52, 0
    %v143 = vsel %vm69, %v53, 0
    %v146 = vsel %vm69, %v54, 0
    %v149 = vsel %vm69, %v55, 0
    %v152 = vsel %vm69, %v56, 0
    %v155 = vsel %vm69, %v57, 0
    %v158 = vsel %vm69, %v58, 0
    %v161 = vsel %vm69, %v59, 0
    %v164 = vsel %vm69, %v60, 0
    %v167 = vsel %vm69, %v61, 0
    %v170 = vsel %vm69, %v62, 0
    %v173 = vsel %vm69, %v63, 0
    %v176 = vsel %vm69, %v64, 0
    %178 = vmatprep.subr.mxu0 0.0
    %179 = vmatpush1.xpose.msra.mxu0 %v83
    %180 = vmatprep.subr.mxu0 0.0
    %181 = vmatpush1.xpose.msra.mxu0 %v86
    %182 = vmatprep.subr.mxu0 0.0
    %183 = vmatpush1.xpose.msra.mxu0 %v89
    %184 = vmatprep.subr.mxu0 0.0
    %185 = vmatpush1.xpose.msra.mxu0 %v92
    %186 = vmatprep.subr.mxu0 0.0
    %187 = vmatpush1.xpose.msra.mxu0 %v95
    %188 = vmatprep.subr.mxu0 0.0
    %189 = vmatpush1.xpose.msra.mxu0 %v98
    %190 = vmatprep.subr.mxu0 0.0
    %191 = vmatpush1.xpose.msra.mxu0 %v101
    %192 = vmatprep.subr.mxu0 0.0
    %193 = vmatpush1.xpose.msra.mxu0 %v104
    %194 = vmatprep.subr.mxu0 0.0
    %195 = vmatpush1.xpose.msra.mxu0 %v107
    %196 = vmatprep.subr.mxu0 0.0
    %197 = vmatpush1.xpose.msra.mxu0 %v110
    %198 = vmatprep.subr.mxu0 0.0
    %199 = vmatpush1.xpose.msra.mxu0 %v113
    %200 = vmatprep.subr.mxu0 0.0
    %201 = vmatpush1.xpose.msra.mxu0 %v116
    %202 = vmatprep.subr.mxu0 0.0
    %203 = vmatpush1.xpose.msra.mxu0 %v119
    %204 = vmatprep.subr.mxu0 0.0
    %205 = vmatpush1.xpose.msra.mxu0 %v122
    %206 = vmatprep.subr.mxu0 0.0
    %207 = vmatpush1.xpose.msra.mxu0 %v125
    %208 = vmatprep.subr.mxu0 0.0
    %209 = vmatpush1.xpose.msra.mxu0 %v128
    %210 = vmatprep.subr.mxu0 0.0
    %211 = vmatpush1.xpose.msra.mxu0 %v131
    %212 = vmatprep.subr.mxu0 0.0
    %213 = vmatpush1.xpose.msra.mxu0 %v134
    %214 = vmatprep.subr.mxu0 0.0
    %215 = vmatpush1.xpose.msra.mxu0 %v137
    %216 = vmatprep.subr.mxu0 0.0
    %217 = vmatpush1.xpose.msra.mxu0 %v140
    %218 = vmatprep.subr.mxu0 0.0
    %219 = vmatpush1.xpose.msra.mxu0 %v143
    %220 = vmatprep.subr.mxu0 0.0
    %221 = vmatpush1.xpose.msra.mxu0 %v146
    %222 = vmatprep.subr.mxu0 0.0
    %223 = vmatpush1.xpose.msra.mxu0 %v149
    %224 = vmatprep.subr.mxu0 0.0
    %225 = vmatpush1.xpose.msra.mxu0 %v152
    %226 = vmatprep.subr.mxu0 0.0
    %227 = vmatpush1.xpose.msra.mxu0 %v155
    %228 = vmatprep.subr.mxu0 0.0
    %229 = vmatpush1.xpose.msra.mxu0 %v158
    %230 = vmatprep.subr.mxu0 0.0
    %231 = vmatpush1.xpose.msra.mxu0 %v161
    %232 = vmatprep.subr.mxu0 0.0
    %233 = vmatpush1.xpose.msra.mxu0 %v164
    %234 = vmatprep.subr.mxu0 0.0
    %235 = vmatpush1.xpose.msra.mxu0 %v167
    %236 = vmatprep.subr.mxu0 0.0
    %237 = vmatpush1.xpose.msra.mxu0 %v170
    %238 = vmatprep.subr.mxu0 0.0
    %239 = vmatpush1.xpose.msra.mxu0 %v173
    %240 = vmatprep.subr.mxu0 0.0
    %241 = vmatpush1.xpose.msra.mxu0 %v176
    %242 = vmatprep.mubr.f32.mxu0 0.0
    %243 = vmatmul.mubr.f32.gmra.mrb[0].mxu0 %v71
    %v244 = vpop.f32.mrb[0].mxu0
    %v245 = vadd.f32 0.0, %v244
    %v246 = vpop.f32.mrb[0].mxu0
    %v247 = vadd.f32 0.0, %v246
    %248 = vmatprep.mubr.f32.mxu0 0.0
    %249 = vmatmul.mubr.f32.gmra.mrb[0].mxu0 %v74
    %v250 = vpop.f32.mrb[0].mxu0
    %v251 = vadd.f32 0.0, %v250
    %v252 = vpop.f32.mrb[0].mxu0
    %v253 = vadd.f32 0.0, %v252
    %254 = vmatprep.mubr.f32.mxu0 0.0
    %255 = vmatmul.mubr.f32.gmra.mrb[0].mxu0 %v77
    %v256 = vpop.f32.mrb[0].mxu0
    %v257 = vadd.f32 0.0, %v256
    %v258 = vpop.f32.mrb[0].mxu0
    %v259 = vadd.f32 0.0, %v258
    %260 = vmatprep.mubr.f32.mxu0 0.0
    %261 = vmatmul.mubr.f32.gmra.mrb[0].mxu0 %v80
    %v262 = vpop.f32.mrb[0].mxu0
    %v263 = vadd.f32 0.0, %v262
    %v264 = vpop.f32.mrb[0].mxu0
    %v265 = vadd.f32 0.0, %v264
    %266 = vdwg.mxu0
    %v267 = vld [vmem:[%s2] sm:$0xff]
    %v268 = vld [vmem:[%s2 + $0x8] sm:$0xff]
    %v269 = vld [vmem:[%s2 + $0x10] sm:$0xff]
    %v270 = vld [vmem:[%s2 + $0x18] sm:$0xff]
    %v271 = vld [vmem:[%s3] sm:$0xff]
    %v272 = vld [vmem:[%s3 + $0x8] sm:$0xff]
    %v273 = vld [vmem:[%s3 + $0x10] sm:$0xff]
    %v274 = vld [vmem:[%s3 + $0x18] sm:$0xff]
    %v275 = vadd.f32 %v245, %v251
    %v276 = vadd.f32 %v275, %v257
    %v277 = vadd.f32 %v276, %v263
    %v278 = vrot.slane %v277, 4
    %v279 = vadd.f32 %v277, %v278
    %v280 = vrot.slane %v279, 2
    %v281 = vadd.f32 %v279, %v280
    %v282 = vrot.slane %v281, 1
    %v283 = vadd.f32 %v281, %v282
    %v284 = vadd.f32 %v247, %v253
    %v285 = vadd.f32 %v284, %v259
    %v286 = vadd.f32 %v285, %v265
    %v287 = vrot.slane %v286, 4
    %v288 = vadd.f32 %v286, %v287
    %v289 = vrot.slane %v288, 2
    %v290 = vadd.f32 %v288, %v289
    %v291 = vrot.slane %v290, 1
    %v292 = vadd.f32 %v290, %v291
    %v293 = vrcp.pop 32.0
    %v294 = vmul.f32 %v283, %v293
    %v295 = vmul.f32 %v292, %v293
    %v296 = vsub.f32 %v245, %v294
    %v297 = vsub.f32 %v247, %v295
    %v298 = vsub.f32 %v251, %v294
    %v299 = vsub.f32 %v253, %v295
    %v300 = vsub.f32 %v257, %v294
    %v301 = vsub.f32 %v259, %v295
    %v302 = vsub.f32 %v263, %v294
    %v303 = vsub.f32 %v265, %v295
    %v304 = vmul.f32 %v296, %v296
    %v305 = vmul.f32 %v297, %v297
    %v306 = vmul.f32 %v298, %v298
    %v307 = vmul.f32 %v299, %v299
    %v308 = vmul.f32 %v300, %v300
    %v309 = vmul.f32 %v301, %v301
    %v310 = vmul.f32 %v302, %v302
    %v311 = vmul.f32 %v303, %v303
    %v312 = vadd.f32 %v304, %v306
    %v313 = vadd.f32 %v312, %v308
    %v314 = vadd.f32 %v313, %v310
    %v315 = vrot.slane %v314, 4
    %v316 = vadd.f32 %v314, %v315
    %v317 = vrot.slane %v316, 2
    %v318 = vadd.f32 %v316, %v317
    %v319 = vrot.slane %v318, 1
    %v320 = vadd.f32 %v318, %v319
    %v321 = vadd.f32 %v305, %v307
    %v322 = vadd.f32 %v321, %v309
    %v323 = vadd.f32 %v322, %v311
    %v324 = vrot.slane %v323, 4
    %v325 = vadd.f32 %v323, %v324
    %v326 = vrot.slane %v325, 2
    %v327 = vadd.f32 %v325, %v326
    %v328 = vrot.slane %v327, 1
    %v329 = vadd.f32 %v327, %v328
    %v330 = vmul.f32 %v320, %v293
    %v331 = vmul.f32 %v329, %v293
    %v332 = vadd.f32 %v330, 1e-05
    %v333 = vadd.f32 %v331, 1e-05
    %v334 = vrsqrt.pop %v332
    %v335 = vrsqrt.pop %v333
    %v336 = vmul.f32 %v296, %v334
    %v337 = vmul.f32 %v297, %v335
    %v338 = vmul.f32 %v298, %v334
    %v339 = vmul.f32 %v299, %v335
    %v340 = vmul.f32 %v300, %v334
    %v341 = vmul.f32 %v301, %v335
    %v342 = vmul.f32 %v302, %v334
    %v343 = vmul.f32 %v303, %v335
    %345 = vset.pattern.permute.xlu0 0
    %346 = vperm.xlu0 %345, %v267
    %v347 = vpop.permute.xlu0 %346
    %350 = vset.pattern.permute.xlu0 0
    %351 = vperm.xlu0 %350, %v268
    %v352 = vpop.permute.xlu0 %351
    %355 = vset.pattern.permute.xlu0 0
    %356 = vperm.xlu0 %355, %v269
    %v357 = vpop.permute.xlu0 %356
    %360 = vset.pattern.permute.xlu0 0
    %361 = vperm.xlu0 %360, %v270
    %v362 = vpop.permute.xlu0 %361
    %v364 = vmul.f32 %v336, %v347
    %v365 = vmul.f32 %v337, %v347
    %v366 = vmul.f32 %v338, %v352
    %v367 = vmul.f32 %v339, %v352
    %v368 = vmul.f32 %v340, %v357
    %v369 = vmul.f32 %v341, %v357
    %v370 = vmul.f32 %v342, %v362
    %v371 = vmul.f32 %v343, %v362
    %373 = vset.pattern.permute.xlu0 0
    %374 = vperm.xlu0 %373, %v271
    %v375 = vpop.permute.xlu0 %374
    %378 = vset.pattern.permute.xlu0 0
    %379 = vperm.xlu0 %378, %v272
    %v380 = vpop.permute.xlu0 %379
    %383 = vset.pattern.permute.xlu0 0
    %384 = vperm.xlu0 %383, %v273
    %v385 = vpop.permute.xlu0 %384
    %388 = vset.pattern.permute.xlu0 0
    %389 = vperm.xlu0 %388, %v274
    %v390 = vpop.permute.xlu0 %389
    %v392 = vadd.f32 %v364, %v375
    %v393 = vadd.f32 %v365, %v375
    %v394 = vadd.f32 %v366, %v380
    %v395 = vadd.f32 %v367, %v380
    %v396 = vadd.f32 %v368, %v385
    %v397 = vadd.f32 %v369, %v385
    %v398 = vadd.f32 %v370, %v390
    %v399 = vadd.f32 %v371, %v390
    %v400 = vmax.f32 %v392, 0.0
    %v401 = vmax.f32 %v393, 0.0
    %v402 = vmax.f32 %v394, 0.0
    %v403 = vmax.f32 %v395, 0.0
    %v404 = vmax.f32 %v396, 0.0
    %v405 = vmax.f32 %v397, 0.0
    %v406 = vmax.f32 %v398, 0.0
    %v407 = vmax.f32 %v399, 0.0
    %v408 = vld [vmem:[%s4] sm:$0xff]
    %v409 = vld [vmem:[%s4 + $0x8] sm:$0xff]
    %vm410 = vcmask 261120
    %v412 = vsel %vm410, %v408, 0
    %v415 = vsel %vm410, %v409, 0
    %417 = vmatprep.subr.mxu0 %v401
    %418 = vmatpush1.msra.mxu0 %v400
    %419 = vmatprep.subr.mxu0 %v403
    %420 = vmatpush1.msra.mxu0 %v402
    %421 = vmatprep.subr.mxu0 %v405
    %422 = vmatpush1.msra.mxu0 %v404
    %423 = vmatprep.subr.mxu0 %v407
    %424 = vmatpush1.msra.mxu0 %v406
    %425 = vmatprep.subr.mxu0 0.0
    %426 = vmatpush1.msra.mxu0 0.0
    %427 = vmatprep.subr.mxu0 0.0
    %428 = vmatpush1.msra.mxu0 0.0
    %429 = vmatprep.subr.mxu0 0.0
    %430 = vmatpush1.msra.mxu0 0.0
    %431 = vmatprep.subr.mxu0 0.0
    %432 = vmatpush1.msra.mxu0 0.0
    %433 = vmatprep.subr.mxu0 0.0
    %434 = vmatpush1.msra.mxu0 0.0
    %435 = vmatprep.subr.mxu0 0.0
    %436 = vmatpush1.msra.mxu0 0.0
    %437 = vmatprep.subr.mxu0 0.0
    %438 = vmatpush1.msra.mxu0 0.0
    %439 = vmatprep.subr.mxu0 0.0
    %440 = vmatpush1.msra.mxu0 0.0
    %441 = vmatprep.subr.mxu0 0.0
    %442 = vmatpush1.msra.mxu0 0.0
    %443 = vmatprep.subr.mxu0 0.0
    %444 = vmatpush1.msra.mxu0 0.0
    %445 = vmatprep.subr.mxu0 0.0
    %446 = vmatpush1.msra.mxu0 0.0
    %447 = vmatprep.subr.mxu0 0.0
    %448 = vmatpush1.msra.mxu0 0.0
    %449 = vmatprep.subr.mxu0 0.0
    %450 = vmatpush1.msra.mxu0 0.0
    %451 = vmatprep.subr.mxu0 0.0
    %452 = vmatpush1.msra.mxu0 0.0
    %453 = vmatprep.subr.mxu0 0.0
    %454 = vmatpush1.msra.mxu0 0.0
    %455 = vmatprep.subr.mxu0 0.0
    %456 = vmatpush1.msra.mxu0 0.0
    %457 = vmatprep.subr.mxu0 0.0
    %458 = vmatpush1.msra.mxu0 0.0
    %459 = vmatprep.subr.mxu0 0.0
    %460 = vmatpush1.msra.mxu0 0.0
    %461 = vmatprep.subr.mxu0 0.0
    %462 = vmatpush1.msra.mxu0 0.0
    %463 = vmatprep.subr.mxu0 0.0
    %464 = vmatpush1.msra.mxu0 0.0
    %465 = vmatprep.subr.mxu0 0.0
    %466 = vmatpush1.msra.mxu0 0.0
    %467 = vmatprep.subr.mxu0 0.0
    %468 = vmatpush1.msra.mxu0 0.0
    %469 = vmatprep.subr.mxu0 0.0
    %470 = vmatpush1.msra.mxu0 0.0
    %471 = vmatprep.subr.mxu0 0.0
    %472 = vmatpush1.msra.mxu0 0.0
    %473 = vmatprep.subr.mxu0 0.0
    %474 = vmatpush1.msra.mxu0 0.0
    %475 = vmatprep.subr.mxu0 0.0
    %476 = vmatpush1.msra.mxu0 0.0
    %477 = vmatprep.subr.mxu0 0.0
    %478 = vmatpush1.msra.mxu0 0.0
    %479 = vmatprep.subr.mxu0 0.0
    %480 = vmatpush1.msra.mxu0 0.0
    %481 = vmatprep.mubr.f32.mxu0 0.0
    %482 = vmatmul.mubr.f32.gmra.mrb[0].mxu0 %v412
    %v483 = vpop.f32.mrb[0].mxu0
    %v484 = vadd.f32 0.0, %v483
    %v485 = vpop.f32.mrb[0].mxu0
    %v486 = vadd.f32 0.0, %v485
    %487 = vmatprep.mubr.f32.mxu0 0.0
    %488 = vmatmul.mubr.f32.gmra.mrb[0].mxu0 %v415
    %v489 = vpop.f32.mrb[0].mxu0
    %v490 = vadd.f32 0.0, %v489
    %v491 = vpop.f32.mrb[0].mxu0
    %v492 = vadd.f32 0.0, %v491
    %493 = vdwg.mxu0
    %v494 = vld [vmem:[%s5] sm:$0xff]
    %v495 = vld [vmem:[%s5 + $0x8] sm:$0xff]
    %v496 = vld [vmem:[%s6] sm:$0xff]
    %v497 = vld [vmem:[%s6 + $0x8] sm:$0xff]
    %v498 = vadd.f32 %v484, %v490
    %v499 = vrot.slane %v498, 4
    %v500 = vadd.f32 %v498, %v499
    %v501 = vrot.slane %v500, 2
    %v502 = vadd.f32 %v500, %v501
    %v503 = vrot.slane %v502, 1
    %v504 = vadd.f32 %v502, %v503
    %v505 = vadd.f32 %v486, %v492
    %v506 = vrot.slane %v505, 4
    %v507 = vadd.f32 %v505, %v506
    %v508 = vrot.slane %v507, 2
    %v509 = vadd.f32 %v507, %v508
    %v510 = vrot.slane %v509, 1
    %v511 = vadd.f32 %v509, %v510
    %v512 = vrcp.pop 16.0
    %v513 = vmul.f32 %v504, %v512
    %v514 = vmul.f32 %v511, %v512
    %v515 = vsub.f32 %v484, %v513
    %v516 = vsub.f32 %v486, %v514
    %v517 = vsub.f32 %v490, %v513
    %v518 = vsub.f32 %v492, %v514
    %v519 = vmul.f32 %v515, %v515
    %v520 = vmul.f32 %v516, %v516
    %v521 = vmul.f32 %v517, %v517
    %v522 = vmul.f32 %v518, %v518
    %v523 = vadd.f32 %v519, %v521
    %v524 = vrot.slane %v523, 4
    %v525 = vadd.f32 %v523, %v524
    %v526 = vrot.slane %v525, 2
    %v527 = vadd.f32 %v525, %v526
    %v528 = vrot.slane %v527, 1
    %v529 = vadd.f32 %v527, %v528
    %v530 = vadd.f32 %v520, %v522
    %v531 = vrot.slane %v530, 4
    %v532 = vadd.f32 %v530, %v531
    %v533 = vrot.slane %v532, 2
    %v534 = vadd.f32 %v532, %v533
    %v535 = vrot.slane %v534, 1
    %v536 = vadd.f32 %v534, %v535
    %v537 = vmul.f32 %v529, %v512
    %v538 = vmul.f32 %v536, %v512
    %v539 = vadd.f32 %v537, 1e-05
    %v540 = vadd.f32 %v538, 1e-05
    %v541 = vrsqrt.pop %v539
    %v542 = vrsqrt.pop %v540
    %v543 = vmul.f32 %v515, %v541
    %v544 = vmul.f32 %v516, %v542
    %v545 = vmul.f32 %v517, %v541
    %v546 = vmul.f32 %v518, %v542
    %548 = vset.pattern.permute.xlu0 0
    %549 = vperm.xlu0 %548, %v494
    %v550 = vpop.permute.xlu0 %549
    %553 = vset.pattern.permute.xlu0 0
    %554 = vperm.xlu0 %553, %v495
    %v555 = vpop.permute.xlu0 %554
    %v557 = vmul.f32 %v543, %v550
    %v558 = vmul.f32 %v544, %v550
    %v559 = vmul.f32 %v545, %v555
    %v560 = vmul.f32 %v546, %v555
    %562 = vset.pattern.permute.xlu0 0
    %563 = vperm.xlu0 %562, %v496
    %v564 = vpop.permute.xlu0 %563
    %567 = vset.pattern.permute.xlu0 0
    %568 = vperm.xlu0 %567, %v497
    %v569 = vpop.permute.xlu0 %568
    %v571 = vadd.f32 %v557, %v564
    %v572 = vadd.f32 %v558, %v564
    %v573 = vadd.f32 %v559, %v569
    %v574 = vadd.f32 %v560, %v569
    %v575 = vmax.f32 %v571, 0.0
    %v576 = vmax.f32 %v572, 0.0
    %v577 = vmax.f32 %v573, 0.0
    %v578 = vmax.f32 %v574, 0.0
    %v579 = vld [vmem:[%s7] sm:$0xff]
    %v580 = vld [vmem:[%s8] sm:$0xff]
    %582 = vset.pattern.permute.xlu0 0
    %583 = vperm.xlu0 %582, %v580
    %v584 = vpop.permute.xlu0 %583
    %vm586 = vcmask 130048
    %v588 = vsel %vm586, %v579, 0
    %590 = vmatprep.subr.mxu0 %v576
    %591 = vmatpush1.msra.mxu0 %v575
    %592 = vmatprep.subr.mxu0 %v578
    %593 = vmatpush1.msra.mxu0 %v577
    %594 = vmatprep.subr.mxu0 0.0
    %595 = vmatpush1.msra.mxu0 0.0
    %596 = vmatprep.subr.mxu0 0.0
    %597 = vmatpush1.msra.mxu0 0.0
    %598 = vmatprep.subr.mxu0 0.0
    %599 = vmatpush1.msra.mxu0 0.0
    %600 = vmatprep.subr.mxu0 0.0
    %601 = vmatpush1.msra.mxu0 0.0
    %602 = vmatprep.subr.mxu0 0.0
    %603 = vmatpush1.msra.mxu0 0.0
    %604 = vmatprep.subr.mxu0 0.0
    %605 = vmatpush1.msra.mxu0 0.0
    %606 = vmatprep.subr.mxu0 0.0
    %607 = vmatpush1.msra.mxu0 0.0
    %608 = vmatprep.subr.mxu0 0.0
    %609 = vmatpush1.msra.mxu0 0.0
    %610 = vmatprep.subr.mxu0 0.0
    %611 = vmatpush1.msra.mxu0 0.0
    %612 = vmatprep.subr.mxu0 0.0
    %613 = vmatpush1.msra.mxu0 0.0
    %614 = vmatprep.subr.mxu0 0.0
    %615 = vmatpush1.msra.mxu0 0.0
    %616 = vmatprep.subr.mxu0 0.0
    %617 = vmatpush1.msra.mxu0 0.0
    %618 = vmatprep.subr.mxu0 0.0
    %619 = vmatpush1.msra.mxu0 0.0
    %620 = vmatprep.subr.mxu0 0.0
    %621 = vmatpush1.msra.mxu0 0.0
    %622 = vmatprep.subr.mxu0 0.0
    %623 = vmatpush1.msra.mxu0 0.0
    %624 = vmatprep.subr.mxu0 0.0
    %625 = vmatpush1.msra.mxu0 0.0
    %626 = vmatprep.subr.mxu0 0.0
    %627 = vmatpush1.msra.mxu0 0.0
    %628 = vmatprep.subr.mxu0 0.0
    %629 = vmatpush1.msra.mxu0 0.0
    %630 = vmatprep.subr.mxu0 0.0
    %631 = vmatpush1.msra.mxu0 0.0
    %632 = vmatprep.subr.mxu0 0.0
    %633 = vmatpush1.msra.mxu0 0.0
    %634 = vmatprep.subr.mxu0 0.0
    %635 = vmatpush1.msra.mxu0 0.0
    %636 = vmatprep.subr.mxu0 0.0
    %637 = vmatpush1.msra.mxu0 0.0
    %638 = vmatprep.subr.mxu0 0.0
    %639 = vmatpush1.msra.mxu0 0.0
    %640 = vmatprep.subr.mxu0 0.0
    %641 = vmatpush1.msra.mxu0 0.0
    %642 = vmatprep.subr.mxu0 0.0
    %643 = vmatpush1.msra.mxu0 0.0
    %644 = vmatprep.subr.mxu0 0.0
    %645 = vmatpush1.msra.mxu0 0.0
    %646 = vmatprep.subr.mxu0 0.0
    %647 = vmatpush1.msra.mxu0 0.0
    %648 = vmatprep.subr.mxu0 0.0
    %649 = vmatpush1.msra.mxu0 0.0
    %650 = vmatprep.subr.mxu0 0.0
    %651 = vmatpush1.msra.mxu0 0.0
    %652 = vmatprep.subr.mxu0 0.0
    %653 = vmatpush1.msra.mxu0 0.0
    %654 = vmatprep.mubr.f32.mxu0 0.0
    %655 = vmatmul.mubr.f32.gmra.mrb[0].mxu0 %v588
    %v656 = vpop.f32.mrb[0].mxu0
    %v657 = vadd.f32 %v584, %v656
    %v658 = vpop.f32.mrb[0].mxu0
    %v659 = vadd.f32 %v584, %v658
    %660 = vdwg.mxu0
    %v661 = vmul.f32 %v657, %v657
    %v662 = vmul.f32 %v659, %v659
    %v663 = vrot.slane %v661, 4
    %v664 = vadd.f32 %v661, %v663
    %v665 = vrot.slane %v664, 2
    %v666 = vadd.f32 %v664, %v665
    %v667 = vrot.slane %v666, 1
    %v668 = vadd.f32 %v666, %v667
    %v669 = vrot.slane %v662, 4
    %v670 = vadd.f32 %v662, %v669
    %v671 = vrot.slane %v670, 2
    %v672 = vadd.f32 %v670, %v671
    %v673 = vrot.slane %v672, 1
    %v674 = vadd.f32 %v672, %v673
    %v675 = vmax.f32 %v668, 1e-24
    %v676 = vmax.f32 %v674, 1e-24
    %v677 = vrsqrt.pop %v675
    %v678 = vrsqrt.pop %v676
    %v679 = vmul.f32 %v657, %v677
    %v680 = vmul.f32 %v659, %v678
    %v683 = vcombine.low %v679, %v680
    %685 = vst [vmem:[#allocation2] sm:$0x77] %v683
    // Predicated region
    $region38: #{tpu_custom_call.1} parent=1 // pred_check
      _
    $region39: #{tpu_custom_call.1} parent=1 // pred_check_branch
      %687 = sbr.rel (0) target = $region41
    $region40: #{tpu_custom_call.1} parent=1 // pred_region
      %s689 = ssub.s32 128, 128
      %690 = vsyncadd [#allocation3], %s689
      %s692 = sshll.u32 [#allocation2], 4
      %s693 = int_to_ptr.vmem [resolvable:$true] %s692
      %695 = dma.vmem_to_hbm [thread:$0]  %s693, 128, %s9, [#allocation3]
    $region41: #{tpu_custom_call.1} parent=1 // pred_fallthru
      _
    // Predicated region
    $region42: #{tpu_custom_call.1} parent=1 // pred_check
      _
    $region43: #{tpu_custom_call.1} parent=1 // pred_check_branch
      %697 = sbr.rel (0) target = $region45
    $region44: #{tpu_custom_call.1} parent=1 // pred_region
      %698 = dma.done [#allocation3], 128
    $region45: #{tpu_custom_call.1} parent=1 // pred_fallthru
      _
    %699 = vsyncpa [#allocation3], 1

</llo_original>
